<compile_context>
chip_gen: v6e
topology: v6e:2x2x1
jax: 0.10.0
libtpu: 0.0.40
codegen_flags: <defaults>
</compile_context>

<pallas_src>
import functools
import math

import jax
import jax.numpy as jnp
from jax import lax
from jax.experimental import pallas as pl
from jax.experimental.pallas import tpu as pltpu


def _propagate(dad_bf16, h, alpha):
    """Apply (alpha*I - DAD)(I + DAD) @ h without forming the N x N filter:
         u = h + DAD @ h ;  result = alpha*u - DAD @ u
    Two (N,N)@(N,F) MXU matmuls (bf16 operands, f32 accumulation)."""
    t = jnp.dot(dad_bf16, h.astype(jnp.bfloat16),
                preferred_element_type=jnp.float32)
    u = h + t
    du = jnp.dot(dad_bf16, u.astype(jnp.bfloat16),
                 preferred_element_type=jnp.float32)
    return alpha * u - du


def midgcn_kernel(adj_ref, x_ref, w_hid_ref, w_out_ref, b_out_ref, out_ref, *,
                  alpha, nclass):
    adj = adj_ref[...]                                    # (N, N) f32

    # ---- mid_filter_2: middle-pass degree normalization (f32) -------------
    rowsum = jnp.sum(adj, axis=1, keepdims=True)          # (N, 1)
    colsum = jnp.sum(adj, axis=0, keepdims=True)          # (1, N)
    d_row = jnp.where(rowsum > 0.0, lax.rsqrt(rowsum), 0.0)
    d_col = jnp.where(colsum > 0.0, lax.rsqrt(colsum), 0.0)
    # DAD = D_row @ A @ D_col  (diagonal scalings -> broadcasts), bf16 for MXU.
    dad = (d_row * adj * d_col).astype(jnp.bfloat16)      # (N, N) bf16

    # ---- GCN layers (dropout = identity in eval mode) ----------------------
    x = x_ref[...].astype(jnp.bfloat16)                   # (N, nfeat)
    h = jnp.dot(x, w_hid_ref[...].astype(jnp.bfloat16),
                preferred_element_type=jnp.float32)       # (N, nhid_p)
    h = jnp.maximum(_propagate(dad, h, alpha), 0.0)       # M @ (x W_hid), relu

    logits = jnp.dot(h.astype(jnp.bfloat16),
                     w_out_ref[...].astype(jnp.bfloat16),
                     preferred_element_type=jnp.float32)  # (N, nclass_p)
    logits = _propagate(dad, logits, alpha) + b_out_ref[...]

    # Padded class lanes: force to a large negative so they contribute ~0 to
    # the softmax normalizer (they are sliced off outside the kernel).
    col_ids = lax.broadcasted_iota(jnp.int32, logits.shape, 1)
    logits = jnp.where(col_ids < nclass, logits, -1e30)

    # ---- log_softmax along the class dim -----------------------------------
    zmax = jnp.max(logits, axis=-1, keepdims=True)
    z = logits - zmax
    lse = jnp.log(jnp.sum(jnp.exp(z), axis=-1, keepdims=True))
    out_ref[...] = z - lse


def _round_up(v, m):
    return ((v + m - 1) // m) * m


def midgcn_forward(adj, x, w_hid, w_out, b_out, *, alpha=0.5):
    n, nfeat = x.shape
    nhid = w_hid.shape[1]
    nclass = w_out.shape[1]

    # Lane-dense intermediates / output: zero-pad the hidden and class dims
    # up to multiples of 128 lanes.  Zero padding is numerically exact (padded
    # hidden columns stay 0, padded class lanes are masked before softmax).
    nhid_p = max(128, _round_up(nhid, 128))
    nclass_p = max(128, _round_up(nclass, 128))
    w_hid_p = jnp.pad(w_hid, ((0, 0), (0, nhid_p - nhid)))
    w_out_p = jnp.pad(w_out, ((0, nhid_p - nhid), (0, nclass_p - nclass)))
    b_out_p = jnp.pad(b_out, ((0, 0), (0, nclass_p - nclass)))

    # VMEM budget from actual resident buffers: adj (f32) + DAD (f32 temp +
    # bf16) plus feature-width temporaries; floor at the 32 MiB default scoped
    # limit and cap at v7x's 64 MiB physical VMEM.
    fmax = max(nfeat, nhid_p, nclass_p)
    vmem_bytes = 3 * n * n * 4 + 12 * n * fmax * 4 + (1 << 20)
    vmem_limit = int(min(max(vmem_bytes, 32 << 20), 64 << 20))

    # FLOPs after factoring: 4 DAD propagations (2 per layer) + dense matmuls.
    flops = (4 * n * n * (nhid_p + nclass_p)
             + 2 * n * nfeat * nhid_p + 2 * n * nhid_p * nclass_p)
    cost = pl.CostEstimate(
        flops=flops,
        transcendentals=n * nclass_p + 3 * n,
        bytes_accessed=4 * (n * n + n * nfeat + nfeat * nhid_p
                            + nhid_p * nclass_p + nclass_p + n * nclass_p),
    )

    vmem_spec = pl.BlockSpec(memory_space=pltpu.MemorySpace.VMEM)
    out_padded = pl.pallas_call(
        functools.partial(midgcn_kernel, alpha=alpha, nclass=nclass),
        out_shape=jax.ShapeDtypeStruct((n, nclass_p), jnp.float32),
        in_specs=[vmem_spec] * 5,
        out_specs=vmem_spec,
        compiler_params=pltpu.CompilerParams(vmem_limit_bytes=vmem_limit),
        cost_estimate=cost,
    )(adj, x, w_hid_p, w_out_p, b_out_p)
    return out_padded[:, :nclass]


def init_params(key, nfeat, nhid, nclass):
    """Deterministic init matching GraphConvolution.reset_parameters:
    uniform(-stdv, stdv) with stdv = 1/sqrt(out_features)."""
    k1, k2, k3 = jax.random.split(key, 3)
    stdv_h = 1.0 / math.sqrt(nhid)
    stdv_o = 1.0 / math.sqrt(nclass)
    w_hid = jax.random.uniform(k1, (nfeat, nhid), jnp.float32, -stdv_h, stdv_h)
    w_out = jax.random.uniform(k2, (nhid, nclass), jnp.float32, -stdv_o, stdv_o)
    b_out = jax.random.uniform(k3, (1, nclass), jnp.float32, -stdv_o, stdv_o)
    return w_hid, w_out, b_out


if __name__ == "__main__":
    N, NFEAT, NHID, NCLASS = 128, 32, 32, 8
    ALPHA = 0.5

    key = jax.random.PRNGKey(0)
    k_adj, k_x, k_par = jax.random.split(key, 3)

    # Dense random adjacency (binary, symmetric, self-loops -> no zero rows).
    adj = (jax.random.uniform(k_adj, (N, N)) < 0.05).astype(jnp.float32)
    adj = jnp.maximum(adj, adj.T)
    adj = jnp.maximum(adj, jnp.eye(N, dtype=jnp.float32))

    x = jax.random.normal(k_x, (N, NFEAT), jnp.float32)
    w_hid, w_out, b_out = init_params(k_par, NFEAT, NHID, NCLASS)

    out = midgcn_forward(adj, x, w_hid, w_out, b_out, alpha=ALPHA)
    out = jax.block_until_ready(out)

    assert out.shape == (N, NCLASS)
    assert bool(jnp.all(jnp.isfinite(out)))
    # log_softmax rows must (approximately) sum to 1 in probability space.
    assert bool(jnp.all(jnp.abs(jnp.sum(jnp.exp(out), axis=-1) - 1.0) < 1e-3))
    print("KERNEL_OK")
</pallas_src>

<mosaic_0001>
module attributes {stable_mosaic.version = 11 : i64} {
  func.func @midgcn_kernel(%arg0: memref<128x128xf32, #tpu.memory_space<vmem>>, %arg1: memref<128x32xf32, #tpu.memory_space<vmem>>, %arg2: memref<32x128xf32, #tpu.memory_space<vmem>>, %arg3: memref<128x128xf32, #tpu.memory_space<vmem>>, %arg4: memref<1x128xf32, #tpu.memory_space<vmem>>, %arg5: memref<128x128xf32, #tpu.memory_space<vmem>>) attributes {dimension_semantics = [], scalar_prefetch = 0 : i64, scratch_operands = 0 : i64, tpu.core_type = #tpu.core_type<tc>} {
    %c0 = arith.constant 0 : index
    %c0_0 = arith.constant 0 : index
    %0 = vector.load %arg0[%c0, %c0_0] : memref<128x128xf32, #tpu.memory_space<vmem>>, vector<128x128xf32>
    %cst = arith.constant dense<0.000000e+00> : vector<128xf32>
    %1 = vector.multi_reduction <add>, %0, %cst [1] : vector<128x128xf32> to vector<128xf32>
    %2 = vector.shape_cast %1 : vector<128xf32> to vector<128x1xf32>
    %cst_1 = arith.constant dense<0.000000e+00> : vector<128xf32>
    %3 = vector.multi_reduction <add>, %0, %cst_1 [0] : vector<128x128xf32> to vector<128xf32>
    %4 = vector.shape_cast %3 : vector<128xf32> to vector<1x128xf32>
    %cst_2 = arith.constant 0.000000e+00 : f32
    %5 = vector.broadcast %cst_2 : f32 to vector<128x1xf32>
    %6 = arith.cmpf ogt, %2, %5 : vector<128x1xf32>
    %7 = math.rsqrt %2 : vector<128x1xf32>
    %cst_3 = arith.constant 0.000000e+00 : f32
    %8 = vector.broadcast %cst_3 : f32 to vector<128x1xf32>
    %9 = arith.select %6, %7, %8 : vector<128x1xi1>, vector<128x1xf32>
    %cst_4 = arith.constant 0.000000e+00 : f32
    %10 = vector.broadcast %cst_4 : f32 to vector<1x128xf32>
    %11 = arith.cmpf ogt, %4, %10 : vector<1x128xf32>
    %12 = math.rsqrt %4 : vector<1x128xf32>
    %cst_5 = arith.constant 0.000000e+00 : f32
    %13 = vector.broadcast %cst_5 : f32 to vector<1x128xf32>
    %14 = arith.select %11, %12, %13 : vector<1x128xi1>, vector<1x128xf32>
    %15 = vector.broadcast %9 : vector<128x1xf32> to vector<128x128xf32>
    %16 = arith.mulf %15, %0 : vector<128x128xf32>
    %17 = vector.broadcast %14 : vector<1x128xf32> to vector<128x128xf32>
    %18 = arith.mulf %16, %17 : vector<128x128xf32>
    %19 = arith.truncf %18 : vector<128x128xf32> to vector<128x128xbf16>
    %c0_6 = arith.constant 0 : index
    %c0_7 = arith.constant 0 : index
    %20 = vector.load %arg1[%c0_6, %c0_7] : memref<128x32xf32, #tpu.memory_space<vmem>>, vector<128x32xf32>
    %21 = arith.truncf %20 : vector<128x32xf32> to vector<128x32xbf16>
    %c0_8 = arith.constant 0 : index
    %c0_9 = arith.constant 0 : index
    %22 = vector.load %arg2[%c0_8, %c0_9] : memref<32x128xf32, #tpu.memory_space<vmem>>, vector<32x128xf32>
    %23 = arith.truncf %22 : vector<32x128xf32> to vector<32x128xbf16>
    %cst_10 = arith.constant dense<0.000000e+00> : vector<128x128xf32>
    %24 = tpu.matmul %21, %23, %cst_10 {dimension_numbers = #tpu.dot_dimension_numbers<[1], [0], [0], [1], [0, 0, 1, 1], [], []>} : vector<128x32xbf16>, vector<32x128xbf16>, vector<128x128xf32> -> vector<128x128xf32>
    %25 = arith.truncf %24 : vector<128x128xf32> to vector<128x128xbf16>
    %cst_11 = arith.constant dense<0.000000e+00> : vector<128x128xf32>
    %26 = tpu.matmul %19, %25, %cst_11 {dimension_numbers = #tpu.dot_dimension_numbers<[1], [0], [0], [1], [0, 0, 1, 1], [], []>} : vector<128x128xbf16>, vector<128x128xbf16>, vector<128x128xf32> -> vector<128x128xf32>
    %27 = arith.addf %24, %26 : vector<128x128xf32>
    %28 = arith.truncf %27 : vector<128x128xf32> to vector<128x128xbf16>
    %cst_12 = arith.constant dense<0.000000e+00> : vector<128x128xf32>
    %29 = tpu.matmul %19, %28, %cst_12 {dimension_numbers = #tpu.dot_dimension_numbers<[1], [0], [0], [1], [0, 0, 1, 1], [], []>} : vector<128x128xbf16>, vector<128x128xbf16>, vector<128x128xf32> -> vector<128x128xf32>
    %cst_13 = arith.constant 5.000000e-01 : f32
    %30 = vector.broadcast %cst_13 : f32 to vector<128x128xf32>
    %31 = arith.mulf %30, %27 : vector<128x128xf32>
    %32 = arith.subf %31, %29 : vector<128x128xf32>
    %cst_14 = arith.constant 0.000000e+00 : f32
    %33 = vector.broadcast %cst_14 : f32 to vector<128x128xf32>
    %34 = arith.maximumf %32, %33 : vector<128x128xf32>
    %35 = arith.truncf %34 : vector<128x128xf32> to vector<128x128xbf16>
    %c0_15 = arith.constant 0 : index
    %c0_16 = arith.constant 0 : index
    %36 = vector.load %arg3[%c0_15, %c0_16] : memref<128x128xf32, #tpu.memory_space<vmem>>, vector<128x128xf32>
    %37 = arith.truncf %36 : vector<128x128xf32> to vector<128x128xbf16>
    %cst_17 = arith.constant dense<0.000000e+00> : vector<128x128xf32>
    %38 = tpu.matmul %35, %37, %cst_17 {dimension_numbers = #tpu.dot_dimension_numbers<[1], [0], [0], [1], [0, 0, 1, 1], [], []>} : vector<128x128xbf16>, vector<128x128xbf16>, vector<128x128xf32> -> vector<128x128xf32>
    %39 = arith.truncf %38 : vector<128x128xf32> to vector<128x128xbf16>
    %cst_18 = arith.constant dense<0.000000e+00> : vector<128x128xf32>
    %40 = tpu.matmul %19, %39, %cst_18 {dimension_numbers = #tpu.dot_dimension_numbers<[1], [0], [0], [1], [0, 0, 1, 1], [], []>} : vector<128x128xbf16>, vector<128x128xbf16>, vector<128x128xf32> -> vector<128x128xf32>
    %41 = arith.addf %38, %40 : vector<128x128xf32>
    %42 = arith.truncf %41 : vector<128x128xf32> to vector<128x128xbf16>
    %cst_19 = arith.constant dense<0.000000e+00> : vector<128x128xf32>
    %43 = tpu.matmul %19, %42, %cst_19 {dimension_numbers = #tpu.dot_dimension_numbers<[1], [0], [0], [1], [0, 0, 1, 1], [], []>} : vector<128x128xbf16>, vector<128x128xbf16>, vector<128x128xf32> -> vector<128x128xf32>
    %cst_20 = arith.constant 5.000000e-01 : f32
    %44 = vector.broadcast %cst_20 : f32 to vector<128x128xf32>
    %45 = arith.mulf %44, %41 : vector<128x128xf32>
    %46 = arith.subf %45, %43 : vector<128x128xf32>
    %c0_21 = arith.constant 0 : index
    %c0_22 = arith.constant 0 : index
    %47 = vector.load %arg4[%c0_21, %c0_22] : memref<1x128xf32, #tpu.memory_space<vmem>>, vector<1x128xf32>
    %48 = vector.broadcast %47 : vector<1x128xf32> to vector<128x128xf32>
    %49 = arith.addf %46, %48 : vector<128x128xf32>
    %50 = tpu.iota {dimensions = array<i32: 1>} : vector<128x128xi32>
    %c8_i32 = arith.constant 8 : i32
    %51 = vector.broadcast %c8_i32 : i32 to vector<128x128xi32>
    %52 = arith.cmpi slt, %50, %51 : vector<128x128xi32>
    %cst_23 = arith.constant -1.000000e+30 : f32
    %53 = vector.broadcast %cst_23 : f32 to vector<128x128xf32>
    %54 = arith.select %52, %49, %53 : vector<128x128xi1>, vector<128x128xf32>
    %cst_24 = arith.constant dense<0xFF800000> : vector<128xf32>
    %55 = vector.multi_reduction <maximumf>, %54, %cst_24 [1] : vector<128x128xf32> to vector<128xf32>
    %56 = vector.shape_cast %55 : vector<128xf32> to vector<128x1xf32>
    %57 = vector.broadcast %56 : vector<128x1xf32> to vector<128x128xf32>
    %58 = arith.subf %54, %57 : vector<128x128xf32>
    %59 = math.exp %58 : vector<128x128xf32>
    %cst_25 = arith.constant dense<0.000000e+00> : vector<128xf32>
    %60 = vector.multi_reduction <add>, %59, %cst_25 [1] : vector<128x128xf32> to vector<128xf32>
    %61 = vector.shape_cast %60 : vector<128xf32> to vector<128x1xf32>
    %62 = math.log %61 : vector<128x1xf32>
    %63 = vector.broadcast %62 : vector<128x1xf32> to vector<128x128xf32>
    %64 = arith.subf %58, %63 : vector<128x128xf32>
    %c0_26 = arith.constant 0 : index
    %c0_27 = arith.constant 0 : index
    %65 = vector.load %arg5[%c0_26, %c0_27] : memref<128x128xf32, #tpu.memory_space<vmem>>, vector<128x128xf32>
    tpu.vector_store %arg5[%c0_26, %c0_27], %64 {strides = array<i32>} : memref<128x128xf32, #tpu.memory_space<vmem>>, vector<128x128xf32>,
    return
  }
}

</mosaic_0001>

<llo_original>
// kernel: tpu_custom_call.1
$region0: #{tpu_custom_call.1}
  #allocation0 [shape = 'u32[]', space=smem, size = 0x4, offset = 0x4, fixed_abs, tag = 'smem constant byte address 0x4 - core index']
  #allocation1 [shape = 'u32[144,128]{1,0:T(1,128)}', space=vmem, size = 0x12000, scoped, tag = 'internal scratch']
  %s0 = inlined_call_operand.vmem [shape: f32[128,128], index: 0, kind: input, shape index: {}]
  %s1 = inlined_call_operand.vmem [shape: f32[128,32], index: 1, kind: input, shape index: {}]
  %s2 = inlined_call_operand.vmem [shape: f32[32,128], index: 2, kind: input, shape index: {}]
  %s3 = inlined_call_operand.hbm [shape: f32[128,128], index: 3, kind: input, shape index: {}]
  %s4 = inlined_call_operand.vmem [shape: f32[1,128], index: 4, kind: input, shape index: {}]
  %s5 = inlined_call_operand.hbm [shape: f32[128,128], index: 5, kind: output, shape index: {}]
  %s6 = sld [smem:[#allocation0]]
  $region34: #{tpu_custom_call.1} parent=0
    _
  %s8 = ssub.s32 1, %s6
  %s9 = scalar_select 0, %s8, %s6
  $region1: #{tpu_custom_call.1} parent=0
    #allocation2 [shape = 'u8[65536]{0}', space=vmem, size = 0x10000, scoped, tag = 'input window, operand 3, single buffered']
    #allocation3 [shape = 's32[1]{0}', space=sflag, size = 0x4, scoped, tag = 'scoped memory for tpu_custom_call.1']
    #allocation4 [shape = 's32[1]{0}', space=sflag, size = 0x4, scoped, tag = 'scoped memory for tpu_custom_call.1']
    #allocation5 [shape = 'u8[65536]{0}', space=vmem, size = 0x10000, scoped, tag = 'output window, operand 0, single buffered']
    %10 = vsyncpa [#allocation3], 0
    %11 = vsyncpa [#allocation4], 0
    // Predicated region
    $region2: #{tpu_custom_call.1} parent=1 // pred_check
      _
    $region3: #{tpu_custom_call.1} parent=1 // pred_check_branch
      %13 = sbr.rel (0) target = $region5
    $region4: #{tpu_custom_call.1} parent=1 // pred_region
      _
    $region5: #{tpu_custom_call.1} parent=1 // pred_fallthru
      _
    // Predicated region
    $region6: #{tpu_custom_call.1} parent=1 // pred_check
      _
    $region7: #{tpu_custom_call.1} parent=1 // pred_check_branch
      %15 = sbr.rel (0) target = $region9
    $region8: #{tpu_custom_call.1} parent=1 // pred_region
      _
    $region9: #{tpu_custom_call.1} parent=1 // pred_fallthru
      _
    // Predicated region
    $region10: #{tpu_custom_call.1} parent=1 // pred_check
      _
    $region11: #{tpu_custom_call.1} parent=1 // pred_check_branch
      %17 = sbr.rel (0) target = $region13
    $region12: #{tpu_custom_call.1} parent=1 // pred_region
      _
    $region13: #{tpu_custom_call.1} parent=1 // pred_fallthru
      _
    // Predicated region
    $region14: #{tpu_custom_call.1} parent=1 // pred_check
      _
    $region15: #{tpu_custom_call.1} parent=1 // pred_check_branch
      %19 = sbr.rel (0) target = $region17
    $region16: #{tpu_custom_call.1} parent=1 // pred_region
      %s21 = ssub.s32 2048, 2048
      %22 = vsyncadd [#allocation3], %s21
      %s23 = sshll.u32 [#allocation2], 4
      %s24 = int_to_ptr.vmem [resolvable:$true] %s23
      %29 = dma.hbm_to_vmem [thread:$0]  %s3, 2048, %s24, [#allocation3], 128, 128, 8
    $region17: #{tpu_custom_call.1} parent=1 // pred_fallthru
      _
    // Predicated region
    $region18: #{tpu_custom_call.1} parent=1 // pred_check
      _
    $region19: #{tpu_custom_call.1} parent=1 // pred_check_branch
      %31 = sbr.rel (0) target = $region21
    $region20: #{tpu_custom_call.1} parent=1 // pred_region
      _
    $region21: #{tpu_custom_call.1} parent=1 // pred_fallthru
      _
    // Predicated region
    $region22: #{tpu_custom_call.1} parent=1 // pred_check
      _
    $region23: #{tpu_custom_call.1} parent=1 // pred_check_branch
      %33 = sbr.rel (0) target = $region25
    $region24: #{tpu_custom_call.1} parent=1 // pred_region
      %34 = dma.done [#allocation3], 2048
    $region25: #{tpu_custom_call.1} parent=1 // pred_fallthru
      _
    %v36 = vld [vmem:[%s0] sm:$0xff]
    %v37 = vld [vmem:[%s0 + $0x8] sm:$0xff]
    %v38 = vld [vmem:[%s0 + $0x10] sm:$0xff]
    %v39 = vld [vmem:[%s0 + $0x18] sm:$0xff]
    %v40 = vld [vmem:[%s0 + $0x20] sm:$0xff]
    %v41 = vld [vmem:[%s0 + $0x28] sm:$0xff]
    %v42 = vld [vmem:[%s0 + $0x30] sm:$0xff]
    %v43 = vld [vmem:[%s0 + $0x38] sm:$0xff]
    %v44 = vld [vmem:[%s0 + $0x40] sm:$0xff]
    %v45 = vld [vmem:[%s0 + $0x48] sm:$0xff]
    %v46 = vld [vmem:[%s0 + $0x50] sm:$0xff]
    %v47 = vld [vmem:[%s0 + $0x58] sm:$0xff]
    %v48 = vld [vmem:[%s0 + $0x60] sm:$0xff]
    %v49 = vld [vmem:[%s0 + $0x68] sm:$0xff]
    %v50 = vld [vmem:[%s0 + $0x70] sm:$0xff]
    %v51 = vld [vmem:[%s0 + $0x78] sm:$0xff]
    %52 = vadd.xlane.f32.xlu0 %v36
    %v53 = vpop.xlane.xlu0 %52
    %54 = vadd.xlane.f32.xlu0 %v37
    %v55 = vpop.xlane.xlu0 %54
    %56 = vadd.xlane.f32.xlu0 %v38
    %v57 = vpop.xlane.xlu0 %56
    %58 = vadd.xlane.f32.xlu0 %v39
    %v59 = vpop.xlane.xlu0 %58
    %60 = vadd.xlane.f32.xlu0 %v40
    %v61 = vpop.xlane.xlu0 %60
    %62 = vadd.xlane.f32.xlu0 %v41
    %v63 = vpop.xlane.xlu0 %62
    %64 = vadd.xlane.f32.xlu0 %v42
    %v65 = vpop.xlane.xlu0 %64
    %66 = vadd.xlane.f32.xlu0 %v43
    %v67 = vpop.xlane.xlu0 %66
    %68 = vadd.xlane.f32.xlu0 %v44
    %v69 = vpop.xlane.xlu0 %68
    %70 = vadd.xlane.f32.xlu0 %v45
    %v71 = vpop.xlane.xlu0 %70
    %72 = vadd.xlane.f32.xlu0 %v46
    %v73 = vpop.xlane.xlu0 %72
    %74 = vadd.xlane.f32.xlu0 %v47
    %v75 = vpop.xlane.xlu0 %74
    %76 = vadd.xlane.f32.xlu0 %v48
    %v77 = vpop.xlane.xlu0 %76
    %78 = vadd.xlane.f32.xlu0 %v49
    %v79 = vpop.xlane.xlu0 %78
    %80 = vadd.xlane.f32.xlu0 %v50
    %v81 = vpop.xlane.xlu0 %80
    %82 = vadd.xlane.f32.xlu0 %v51
    %v83 = vpop.xlane.xlu0 %82
    %v84 = vadd.f32 %v36, %v37
    %v85 = vadd.f32 %v84, %v38
    %v86 = vadd.f32 %v85, %v39
    %v87 = vadd.f32 %v86, %v40
    %v88 = vadd.f32 %v87, %v41
    %v89 = vadd.f32 %v88, %v42
    %v90 = vadd.f32 %v89, %v43
    %v91 = vadd.f32 %v90, %v44
    %v92 = vadd.f32 %v91, %v45
    %v93 = vadd.f32 %v92, %v46
    %v94 = vadd.f32 %v93, %v47
    %v95 = vadd.f32 %v94, %v48
    %v96 = vadd.f32 %v95, %v49
    %v97 = vadd.f32 %v96, %v50
    %v98 = vadd.f32 %v97, %v51
    %v99 = vrot.slane %v98, 4
    %v100 = vadd.f32 %v98, %v99
    %v101 = vrot.slane %v100, 2
    %v102 = vadd.f32 %v100, %v101
    %v103 = vrot.slane %v102, 1
    %v104 = vadd.f32 %v102, %v103
    %vm105 = vcmp.gt.f32.partialorder %v53, 0.0
    %vm106 = vcmp.gt.f32.partialorder %v55, 0.0
    %vm107 = vcmp.gt.f32.partialorder %v57, 0.0
    %vm108 = vcmp.gt.f32.partialorder %v59, 0.0
    %vm109 = vcmp.gt.f32.partialorder %v61, 0.0
    %vm110 = vcmp.gt.f32.partialorder %v63, 0.0
    %vm111 = vcmp.gt.f32.partialorder %v65, 0.0
    %vm112 = vcmp.gt.f32.partialorder %v67, 0.0
    %vm113 = vcmp.gt.f32.partialorder %v69, 0.0
    %vm114 = vcmp.gt.f32.partialorder %v71, 0.0
    %vm115 = vcmp.gt.f32.partialorder %v73, 0.0
    %vm116 = vcmp.gt.f32.partialorder %v75, 0.0
    %vm117 = vcmp.gt.f32.partialorder %v77, 0.0
    %vm118 = vcmp.gt.f32.partialorder %v79, 0.0
    %vm119 = vcmp.gt.f32.partialorder %v81, 0.0
    %vm120 = vcmp.gt.f32.partialorder %v83, 0.0
    %v121 = vrsqrt.pop %v53
    %v122 = vrsqrt.pop %v55
    %v123 = vrsqrt.pop %v57
    %v124 = vrsqrt.pop %v59
    %v125 = vrsqrt.pop %v61
    %v126 = vrsqrt.pop %v63
    %v127 = vrsqrt.pop %v65
    %v128 = vrsqrt.pop %v67
    %v129 = vrsqrt.pop %v69
    %v130 = vrsqrt.pop %v71
    %v131 = vrsqrt.pop %v73
    %v132 = vrsqrt.pop %v75
    %v133 = vrsqrt.pop %v77
    %v134 = vrsqrt.pop %v79
    %v135 = vrsqrt.pop %v81
    %v136 = vrsqrt.pop %v83
    %v137 = vsel %vm105, %v121, 0.0
    %v138 = vsel %vm106, %v122, 0.0
    %v139 = vsel %vm107, %v123, 0.0
    %v140 = vsel %vm108, %v124, 0.0
    %v141 = vsel %vm109, %v125, 0.0
    %v142 = vsel %vm110, %v126, 0.0
    %v143 = vsel %vm111, %v127, 0.0
    %v144 = vsel %vm112, %v128, 0.0
    %v145 = vsel %vm113, %v129, 0.0
    %v146 = vsel %vm114, %v130, 0.0
    %v147 = vsel %vm115, %v131, 0.0
    %v148 = vsel %vm116, %v132, 0.0
    %v149 = vsel %vm117, %v133, 0.0
    %v150 = vsel %vm118, %v134, 0.0
    %v151 = vsel %vm119, %v135, 0.0
    %v152 = vsel %vm120, %v136, 0.0
    %vm153 = vcmp.gt.f32.partialorder %v104, 0.0
    %v154 = vrsqrt.pop %v104
    %v155 = vsel %vm153, %v154, 0.0
    %v156 = vmul.f32 %v137, %v36
    %v157 = vmul.f32 %v138, %v37
    %v158 = vmul.f32 %v139, %v38
    %v159 = vmul.f32 %v140, %v39
    %v160 = vmul.f32 %v141, %v40
    %v161 = vmul.f32 %v142, %v41
    %v162 = vmul.f32 %v143, %v42
    %v163 = vmul.f32 %v144, %v43
    %v164 = vmul.f32 %v145, %v44
    %v165 = vmul.f32 %v146, %v45
    %v166 = vmul.f32 %v147, %v46
    %v167 = vmul.f32 %v148, %v47
    %v168 = vmul.f32 %v149, %v48
    %v169 = vmul.f32 %v150, %v49
    %v170 = vmul.f32 %v151, %v50
    %v171 = vmul.f32 %v152, %v51
    %v172 = vmul.f32 %v156, %v155
    %v173 = vmul.f32 %v157, %v155
    %v174 = vmul.f32 %v158, %v155
    %v175 = vmul.f32 %v159, %v155
    %v176 = vmul.f32 %v160, %v155
    %v177 = vmul.f32 %v161, %v155
    %v178 = vmul.f32 %v162, %v155
    %v179 = vmul.f32 %v163, %v155
    %v180 = vmul.f32 %v164, %v155
    %v181 = vmul.f32 %v165, %v155
    %v182 = vmul.f32 %v166, %v155
    %v183 = vmul.f32 %v167, %v155
    %v184 = vmul.f32 %v168, %v155
    %v185 = vmul.f32 %v169, %v155
    %v186 = vmul.f32 %v170, %v155
    %v187 = vmul.f32 %v171, %v155
    %v188 = vpack.c.bf16 %v173, %v172
    %v189 = vpack.c.bf16 %v175, %v174
    %v190 = vpack.c.bf16 %v177, %v176
    %v191 = vpack.c.bf16 %v179, %v178
    %v192 = vpack.c.bf16 %v181, %v180
    %v193 = vpack.c.bf16 %v183, %v182
    %v194 = vpack.c.bf16 %v185, %v184
    %v195 = vpack.c.bf16 %v187, %v186
    %v196 = vld [vmem:[%s1] sm:$0xff]
    %v197 = vld [vmem:[%s1 + $0x8] sm:$0xff]
    %v198 = vld [vmem:[%s1 + $0x10] sm:$0xff]
    %v199 = vld [vmem:[%s1 + $0x18] sm:$0xff]
    %v200 = vld [vmem:[%s1 + $0x20] sm:$0xff]
    %v201 = vld [vmem:[%s1 + $0x28] sm:$0xff]
    %v202 = vld [vmem:[%s1 + $0x30] sm:$0xff]
    %v203 = vld [vmem:[%s1 + $0x38] sm:$0xff]
    %v204 = vld [vmem:[%s1 + $0x40] sm:$0xff]
    %v205 = vld [vmem:[%s1 + $0x48] sm:$0xff]
    %v206 = vld [vmem:[%s1 + $0x50] sm:$0xff]
    %v207 = vld [vmem:[%s1 + $0x58] sm:$0xff]
    %v208 = vld [vmem:[%s1 + $0x60] sm:$0xff]
    %v209 = vld [vmem:[%s1 + $0x68] sm:$0xff]
    %v210 = vld [vmem:[%s1 + $0x70] sm:$0xff]
    %v211 = vld [vmem:[%s1 + $0x78] sm:$0xff]
    %v212 = vpack.c.bf16 %v197, %v196
    %v213 = vpack.c.bf16 %v199, %v198
    %v214 = vpack.c.bf16 %v201, %v200
    %v215 = vpack.c.bf16 %v203, %v202
    %v216 = vpack.c.bf16 %v205, %v204
    %v217 = vpack.c.bf16 %v207, %v206
    %v218 = vpack.c.bf16 %v209, %v208
    %v219 = vpack.c.bf16 %v211, %v210
    %v220 = vld [vmem:[%s2] sm:$0xff]
    %v221 = vld [vmem:[%s2 + $0x8] sm:$0xff]
    %v222 = vld [vmem:[%s2 + $0x10] sm:$0xff]
    %v223 = vld [vmem:[%s2 + $0x18] sm:$0xff]
    %v224 = vpack.c.bf16 %v221, %v220
    %v225 = vpack.c.bf16 %v223, %v222
    %vm226 = vcmask 261120
    %v228 = vsel %vm226, %v212, 0
    %v231 = vsel %vm226, %v213, 0
    %v234 = vsel %vm226, %v214, 0
    %v237 = vsel %vm226, %v215, 0
    %v240 = vsel %vm226, %v216, 0
    %v243 = vsel %vm226, %v217, 0
    %v246 = vsel %vm226, %v218, 0
    %v249 = vsel %vm226, %v219, 0
    %251 = vmatprep.subr.bf16.mxu0 0
    %252 = vmatpush1.bf16.msra.mxu0 0
    %253 = vmatprep.subr.bf16.mxu0 0
    %254 = vmatpush1.bf16.msra.mxu0 0
    %255 = vmatprep.subr.bf16.mxu0 0
    %256 = vmatpush1.bf16.msra.mxu0 0
    %257 = vmatprep.subr.bf16.mxu0 0
    %258 = vmatpush1.bf16.msra.mxu0 0
    %259 = vmatprep.subr.bf16.mxu0 0
    %260 = vmatpush1.bf16.msra.mxu0 0
    %261 = vmatprep.subr.bf16.mxu0 0
    %262 = vmatpush1.bf16.msra.mxu0 0
    %263 = vmatprep.subr.bf16.mxu0 0
    %264 = vmatpush1.bf16.msra.mxu0 %v225
    %265 = vmatprep.subr.bf16.mxu0 0
    %266 = vmatpush1.bf16.msra.mxu0 %v224
    %267 = vmatprep.subr.bf16.mxu0 0
    %268 = vmatpush2.bf16.msra.mxu0 0
    %269 = vmatprep.subr.bf16.mxu0 0
    %270 = vmatpush2.bf16.msra.mxu0 0
    %271 = vmatprep.subr.bf16.mxu0 0
    %272 = vmatpush2.bf16.msra.mxu0 0
    %273 = vmatprep.subr.bf16.mxu0 0
    %274 = vmatpush2.bf16.msra.mxu0 0
    %275 = vmatprep.subr.bf16.mxu0 0
    %276 = vmatpush2.bf16.msra.mxu0 0
    %277 = vmatprep.subr.bf16.mxu0 0
    %278 = vmatpush2.bf16.msra.mxu0 0
    %279 = vmatprep.subr.bf16.mxu0 0
    %280 = vmatpush2.bf16.msra.mxu0 0
    %281 = vmatprep.subr.bf16.mxu0 0
    %282 = vmatpush2.bf16.msra.mxu0 0
    %283 = vmatprep.mubr.bf16.mxu0 0
    %284 = vmatmul.mubr.bf16.gmra.mxu0 %v228
    %v285 = vpop.f32.mrf.mxu0
    %v286 = vadd.f32 0.0, %v285
    %v287 = vpop.f32.mrf.mxu0
    %v288 = vpop.f32.mrf.mxu0
    %v289 = vadd.f32 0.0, %v288
    %v290 = vpop.f32.mrf.mxu0
    %291 = vmatprep.mubr.bf16.mxu0 0
    %292 = vmatmul.mubr.bf16.gmra.mxu0 %v231
    %v293 = vpop.f32.mrf.mxu0
    %v294 = vadd.f32 0.0, %v293
    %v295 = vpop.f32.mrf.mxu0
    %v296 = vpop.f32.mrf.mxu0
    %v297 = vadd.f32 0.0, %v296
    %v298 = vpop.f32.mrf.mxu0
    %299 = vmatprep.mubr.bf16.mxu0 0
    %300 = vmatmul.mubr.bf16.gmra.mxu0 %v234
    %v301 = vpop.f32.mrf.mxu0
    %v302 = vadd.f32 0.0, %v301
    %v303 = vpop.f32.mrf.mxu0
    %v304 = vpop.f32.mrf.mxu0
    %v305 = vadd.f32 0.0, %v304
    %v306 = vpop.f32.mrf.mxu0
    %307 = vmatprep.mubr.bf16.mxu0 0
    %308 = vmatmul.mubr.bf16.gmra.mxu0 %v237
    %v309 = vpop.f32.mrf.mxu0
    %v310 = vadd.f32 0.0, %v309
    %v311 = vpop.f32.mrf.mxu0
    %v312 = vpop.f32.mrf.mxu0
    %v313 = vadd.f32 0.0, %v312
    %v314 = vpop.f32.mrf.mxu0
    %315 = vmatprep.mubr.bf16.mxu0 0
    %316 = vmatmul.mubr.bf16.gmra.mxu0 %v240
    %v317 = vpop.f32.mrf.mxu0
    %v318 = vadd.f32 0.0, %v317
    %v319 = vpop.f32.mrf.mxu0
    %v320 = vpop.f32.mrf.mxu0
    %v321 = vadd.f32 0.0, %v320
    %v322 = vpop.f32.mrf.mxu0
    %323 = vmatprep.mubr.bf16.mxu0 0
    %324 = vmatmul.mubr.bf16.gmra.mxu0 %v243
    %v325 = vpop.f32.mrf.mxu0
    %v326 = vadd.f32 0.0, %v325
    %v327 = vpop.f32.mrf.mxu0
    %v328 = vpop.f32.mrf.mxu0
    %v329 = vadd.f32 0.0, %v328
    %v330 = vpop.f32.mrf.mxu0
    %331 = vmatprep.mubr.bf16.mxu0 0
    %332 = vmatmul.mubr.bf16.gmra.mxu0 %v246
    %v333 = vpop.f32.mrf.mxu0
    %v334 = vadd.f32 0.0, %v333
    %v335 = vpop.f32.mrf.mxu0
    %v336 = vpop.f32.mrf.mxu0
    %v337 = vadd.f32 0.0, %v336
    %v338 = vpop.f32.mrf.mxu0
    %339 = vmatprep.mubr.bf16.mxu0 0
    %340 = vmatmul.mubr.bf16.gmra.mxu0 %v249
    %v341 = vpop.f32.mrf.mxu0
    %v342 = vadd.f32 0.0, %v341
    %v343 = vpop.f32.mrf.mxu0
    %v344 = vpop.f32.mrf.mxu0
    %v345 = vadd.f32 0.0, %v344
    %v346 = vpop.f32.mrf.mxu0
    %347 = vdwg.mxu0
    %v348 = vpack.c.bf16 %v289, %v286
    %v349 = vpack.c.bf16 %v297, %v294
    %v350 = vpack.c.bf16 %v305, %v302
    %v351 = vpack.c.bf16 %v313, %v310
    %v352 = vpack.c.bf16 %v321, %v318
    %v353 = vpack.c.bf16 %v329, %v326
    %v354 = vpack.c.bf16 %v337, %v334
    %v355 = vpack.c.bf16 %v345, %v342
    %356 = vmatprep.subr.bf16.mxu0 0
    %357 = vmatpush1.bf16.msra.mxu0 %v355
    %358 = vmatprep.subr.bf16.mxu0 0
    %359 = vmatpush1.bf16.msra.mxu0 %v354
    %360 = vmatprep.subr.bf16.mxu0 0
    %361 = vmatpush1.bf16.msra.mxu0 %v353
    %362 = vmatprep.subr.bf16.mxu0 0
    %363 = vmatpush1.bf16.msra.mxu0 %v352
    %364 = vmatprep.subr.bf16.mxu0 0
    %365 = vmatpush1.bf16.msra.mxu0 %v351
    %366 = vmatprep.subr.bf16.mxu0 0
    %367 = vmatpush1.bf16.msra.mxu0 %v350
    %368 = vmatprep.subr.bf16.mxu0 0
    %369 = vmatpush1.bf16.msra.mxu0 %v349
    %370 = vmatprep.subr.bf16.mxu0 0
    %371 = vmatpush1.bf16.msra.mxu0 %v348
    %372 = vmatprep.subr.bf16.mxu0 0
    %373 = vmatpush2.bf16.msra.mxu0 0
    %374 = vmatprep.subr.bf16.mxu0 0
    %375 = vmatpush2.bf16.msra.mxu0 0
    %376 = vmatprep.subr.bf16.mxu0 0
    %377 = vmatpush2.bf16.msra.mxu0 0
    %378 = vmatprep.subr.bf16.mxu0 0
    %379 = vmatpush2.bf16.msra.mxu0 0
    %380 = vmatprep.subr.bf16.mxu0 0
    %381 = vmatpush2.bf16.msra.mxu0 0
    %382 = vmatprep.subr.bf16.mxu0 0
    %383 = vmatpush2.bf16.msra.mxu0 0
    %384 = vmatprep.subr.bf16.mxu0 0
    %385 = vmatpush2.bf16.msra.mxu0 0
    %386 = vmatprep.subr.bf16.mxu0 0
    %387 = vmatpush2.bf16.msra.mxu0 0
    %388 = vmatprep.mubr.bf16.mxu0 0
    %389 = vmatmul.mubr.bf16.gmra.mxu0 %v188
    %v390 = vpop.f32.mrf.mxu0
    %v391 = vadd.f32 0.0, %v390
    %v392 = vpop.f32.mrf.mxu0
    %v393 = vpop.f32.mrf.mxu0
    %v394 = vadd.f32 0.0, %v393
    %v395 = vpop.f32.mrf.mxu0
    %396 = vmatprep.mubr.bf16.mxu0 0
    %397 = vmatmul.mubr.bf16.gmra.mxu0 %v189
    %v398 = vpop.f32.mrf.mxu0
    %v399 = vadd.f32 0.0, %v398
    %v400 = vpop.f32.mrf.mxu0
    %v401 = vpop.f32.mrf.mxu0
    %v402 = vadd.f32 0.0, %v401
    %v403 = vpop.f32.mrf.mxu0
    %404 = vmatprep.mubr.bf16.mxu0 0
    %405 = vmatmul.mubr.bf16.gmra.mxu0 %v190
    %v406 = vpop.f32.mrf.mxu0
    %v407 = vadd.f32 0.0, %v406
    %v408 = vpop.f32.mrf.mxu0
    %v409 = vpop.f32.mrf.mxu0
    %v410 = vadd.f32 0.0, %v409
    %v411 = vpop.f32.mrf.mxu0
    %412 = vmatprep.mubr.bf16.mxu0 0
    %413 = vmatmul.mubr.bf16.gmra.mxu0 %v191
    %v414 = vpop.f32.mrf.mxu0
    %v415 = vadd.f32 0.0, %v414
    %v416 = vpop.f32.mrf.mxu0
    %v417 = vpop.f32.mrf.mxu0
    %v418 = vadd.f32 0.0, %v417
    %v419 = vpop.f32.mrf.mxu0
    %420 = vmatprep.mubr.bf16.mxu0 0
    %421 = vmatmul.mubr.bf16.gmra.mxu0 %v192
    %v422 = vpop.f32.mrf.mxu0
    %v423 = vadd.f32 0.0, %v422
    %v424 = vpop.f32.mrf.mxu0
    %v425 = vpop.f32.mrf.mxu0
    %v426 = vadd.f32 0.0, %v425
    %v427 = vpop.f32.mrf.mxu0
    %428 = vmatprep.mubr.bf16.mxu0 0
    %429 = vmatmul.mubr.bf16.gmra.mxu0 %v193
    %v430 = vpop.f32.mrf.mxu0
    %v431 = vadd.f32 0.0, %v430
    %v432 = vpop.f32.mrf.mxu0
    %v433 = vpop.f32.mrf.mxu0
    %v434 = vadd.f32 0.0, %v433
    %v435 = vpop.f32.mrf.mxu0
    %436 = vmatprep.mubr.bf16.mxu0 0
    %437 = vmatmul.mubr.bf16.gmra.mxu0 %v194
    %v438 = vpop.f32.mrf.mxu0
    %v439 = vadd.f32 0.0, %v438
    %v440 = vpop.f32.mrf.mxu0
    %v441 = vpop.f32.mrf.mxu0
    %v442 = vadd.f32 0.0, %v441
    %v443 = vpop.f32.mrf.mxu0
    %444 = vmatprep.mubr.bf16.mxu0 0
    %445 = vmatmul.mubr.bf16.gmra.mxu0 %v195
    %v446 = vpop.f32.mrf.mxu0
    %v447 = vadd.f32 0.0, %v446
    %v448 = vpop.f32.mrf.mxu0
    %v449 = vpop.f32.mrf.mxu0
    %v450 = vadd.f32 0.0, %v449
    %v451 = vpop.f32.mrf.mxu0
    %452 = vdwg.mxu0
    %v453 = vadd.f32 %v286, %v391
    %v454 = vadd.f32 %v289, %v394
    %v455 = vadd.f32 %v294, %v399
    %v456 = vadd.f32 %v297, %v402
    %v457 = vadd.f32 %v302, %v407
    %v458 = vadd.f32 %v305, %v410
    %v459 = vadd.f32 %v310, %v415
    %v460 = vadd.f32 %v313, %v418
    %v461 = vadd.f32 %v318, %v423
    %v462 = vadd.f32 %v321, %v426
    %v463 = vadd.f32 %v326, %v431
    %v464 = vadd.f32 %v329, %v434
    %v465 = vadd.f32 %v334, %v439
    %v466 = vadd.f32 %v337, %v442
    %v467 = vadd.f32 %v342, %v447
    %v468 = vadd.f32 %v345, %v450
    %v469 = vpack.c.bf16 %v454, %v453
    %v470 = vpack.c.bf16 %v456, %v455
    %v471 = vpack.c.bf16 %v458, %v457
    %v472 = vpack.c.bf16 %v460, %v459
    %v473 = vpack.c.bf16 %v462, %v461
    %v474 = vpack.c.bf16 %v464, %v463
    %v475 = vpack.c.bf16 %v466, %v465
    %v476 = vpack.c.bf16 %v468, %v467
    %477 = vmatprep.subr.bf16.mxu0 0
    %478 = vmatpush1.bf16.msra.mxu0 %v476
    %479 = vmatprep.subr.bf16.mxu0 0
    %480 = vmatpush1.bf16.msra.mxu0 %v475
    %481 = vmatprep.subr.bf16.mxu0 0
    %482 = vmatpush1.bf16.msra.mxu0 %v474
    %483 = vmatprep.subr.bf16.mxu0 0
    %484 = vmatpush1.bf16.msra.mxu0 %v473
    %485 = vmatprep.subr.bf16.mxu0 0
    %486 = vmatpush1.bf16.msra.mxu0 %v472
    %487 = vmatprep.subr.bf16.mxu0 0
    %488 = vmatpush1.bf16.msra.mxu0 %v471
    %489 = vmatprep.subr.bf16.mxu0 0
    %490 = vmatpush1.bf16.msra.mxu0 %v470
    %491 = vmatprep.subr.bf16.mxu0 0
    %492 = vmatpush1.bf16.msra.mxu0 %v469
    %493 = vmatprep.subr.bf16.mxu0 0
    %494 = vmatpush2.bf16.msra.mxu0 0
    %495 = vmatprep.subr.bf16.mxu0 0
    %496 = vmatpush2.bf16.msra.mxu0 0
    %497 = vmatprep.subr.bf16.mxu0 0
    %498 = vmatpush2.bf16.msra.mxu0 0
    %499 = vmatprep.subr.bf16.mxu0 0
    %500 = vmatpush2.bf16.msra.mxu0 0
    %501 = vmatprep.subr.bf16.mxu0 0
    %502 = vmatpush2.bf16.msra.mxu0 0
    %503 = vmatprep.subr.bf16.mxu0 0
    %504 = vmatpush2.bf16.msra.mxu0 0
    %505 = vmatprep.subr.bf16.mxu0 0
    %506 = vmatpush2.bf16.msra.mxu0 0
    %507 = vmatprep.subr.bf16.mxu0 0
    %508 = vmatpush2.bf16.msra.mxu0 0
    %509 = vmatprep.mubr.bf16.mxu0 0
    %510 = vmatmul.mubr.bf16.gmra.mxu0 %v188
    %v511 = vpop.f32.mrf.mxu0
    %v512 = vadd.f32 0.0, %v511
    %v513 = vpop.f32.mrf.mxu0
    %v514 = vpop.f32.mrf.mxu0
    %v515 = vadd.f32 0.0, %v514
    %v516 = vpop.f32.mrf.mxu0
    %517 = vmatprep.mubr.bf16.mxu0 0
    %518 = vmatmul.mubr.bf16.gmra.mxu0 %v189
    %v519 = vpop.f32.mrf.mxu0
    %v520 = vadd.f32 0.0, %v519
    %v521 = vpop.f32.mrf.mxu0
    %v522 = vpop.f32.mrf.mxu0
    %v523 = vadd.f32 0.0, %v522
    %v524 = vpop.f32.mrf.mxu0
    %525 = vmatprep.mubr.bf16.mxu0 0
    %526 = vmatmul.mubr.bf16.gmra.mxu0 %v190
    %v527 = vpop.f32.mrf.mxu0
    %v528 = vadd.f32 0.0, %v527
    %v529 = vpop.f32.mrf.mxu0
    %v530 = vpop.f32.mrf.mxu0
    %v531 = vadd.f32 0.0, %v530
    %v532 = vpop.f32.mrf.mxu0
    %533 = vmatprep.mubr.bf16.mxu0 0
    %534 = vmatmul.mubr.bf16.gmra.mxu0 %v191
    %v535 = vpop.f32.mrf.mxu0
    %v536 = vadd.f32 0.0, %v535
    %v537 = vpop.f32.mrf.mxu0
    %v538 = vpop.f32.mrf.mxu0
    %v539 = vadd.f32 0.0, %v538
    %v540 = vpop.f32.mrf.mxu0
    %541 = vmatprep.mubr.bf16.mxu0 0
    %542 = vmatmul.mubr.bf16.gmra.mxu0 %v192
    %v543 = vpop.f32.mrf.mxu0
    %v544 = vadd.f32 0.0, %v543
    %v545 = vpop.f32.mrf.mxu0
    %v546 = vpop.f32.mrf.mxu0
    %v547 = vadd.f32 0.0, %v546
    %v548 = vpop.f32.mrf.mxu0
    %549 = vmatprep.mubr.bf16.mxu0 0
    %550 = vmatmul.mubr.bf16.gmra.mxu0 %v193
    %v551 = vpop.f32.mrf.mxu0
    %v552 = vadd.f32 0.0, %v551
    %v553 = vpop.f32.mrf.mxu0
    %v554 = vpop.f32.mrf.mxu0
    %v555 = vadd.f32 0.0, %v554
    %v556 = vpop.f32.mrf.mxu0
    %557 = vmatprep.mubr.bf16.mxu0 0
    %558 = vmatmul.mubr.bf16.gmra.mxu0 %v194
    %v559 = vpop.f32.mrf.mxu0
    %v560 = vadd.f32 0.0, %v559
    %v561 = vpop.f32.mrf.mxu0
    %v562 = vpop.f32.mrf.mxu0
    %v563 = vadd.f32 0.0, %v562
    %v564 = vpop.f32.mrf.mxu0
    %565 = vmatprep.mubr.bf16.mxu0 0
    %566 = vmatmul.mubr.bf16.gmra.mxu0 %v195
    %v567 = vpop.f32.mrf.mxu0
    %v568 = vadd.f32 0.0, %v567
    %v569 = vpop.f32.mrf.mxu0
    %v570 = vpop.f32.mrf.mxu0
    %v571 = vadd.f32 0.0, %v570
    %v572 = vpop.f32.mrf.mxu0
    %573 = vdwg.mxu0
    %v574 = vmul.f32 %v453, 0.5
    %v575 = vmul.f32 %v454, 0.5
    %v576 = vmul.f32 %v455, 0.5
    %v577 = vmul.f32 %v456, 0.5
    %v578 = vmul.f32 %v457, 0.5
    %v579 = vmul.f32 %v458, 0.5
    %v580 = vmul.f32 %v459, 0.5
    %v581 = vmul.f32 %v460, 0.5
    %v582 = vmul.f32 %v461, 0.5
    %v583 = vmul.f32 %v462, 0.5
    %v584 = vmul.f32 %v463, 0.5
    %v585 = vmul.f32 %v464, 0.5
    %v586 = vmul.f32 %v465, 0.5
    %v587 = vmul.f32 %v466, 0.5
    %v588 = vmul.f32 %v467, 0.5
    %v589 = vmul.f32 %v468, 0.5
    %v590 = vsub.f32 %v574, %v512
    %v591 = vsub.f32 %v575, %v515
    %v592 = vsub.f32 %v576, %v520
    %v593 = vsub.f32 %v577, %v523
    %v594 = vsub.f32 %v578, %v528
    %v595 = vsub.f32 %v579, %v531
    %v596 = vsub.f32 %v580, %v536
    %v597 = vsub.f32 %v581, %v539
    %v598 = vsub.f32 %v582, %v544
    %v599 = vsub.f32 %v583, %v547
    %v600 = vsub.f32 %v584, %v552
    %v601 = vsub.f32 %v585, %v555
    %v602 = vsub.f32 %v586, %v560
    %v603 = vsub.f32 %v587, %v563
    %v604 = vsub.f32 %v588, %v568
    %v605 = vsub.f32 %v589, %v571
    %v606 = vmax.f32 %v590, 0.0
    %v607 = vmax.f32 %v591, 0.0
    %v608 = vmax.f32 %v592, 0.0
    %v609 = vmax.f32 %v593, 0.0
    %v610 = vmax.f32 %v594, 0.0
    %v611 = vmax.f32 %v595, 0.0
    %v612 = vmax.f32 %v596, 0.0
    %v613 = vmax.f32 %v597, 0.0
    %v614 = vmax.f32 %v598, 0.0
    %v615 = vmax.f32 %v599, 0.0
    %v616 = vmax.f32 %v600, 0.0
    %v617 = vmax.f32 %v601, 0.0
    %v618 = vmax.f32 %v602, 0.0
    %v619 = vmax.f32 %v603, 0.0
    %v620 = vmax.f32 %v604, 0.0
    %v621 = vmax.f32 %v605, 0.0
    %v622 = vpack.c.bf16 %v607, %v606
    %v623 = vpack.c.bf16 %v609, %v608
    %v624 = vpack.c.bf16 %v611, %v610
    %v625 = vpack.c.bf16 %v613, %v612
    %v626 = vpack.c.bf16 %v615, %v614
    %v627 = vpack.c.bf16 %v617, %v616
    %v628 = vpack.c.bf16 %v619, %v618
    %v629 = vpack.c.bf16 %v621, %v620
    %v630 = vld [vmem:[#allocation2] sm:$0xff]
    %v631 = vld [vmem:[#allocation2 + $0x8] sm:$0xff]
    %v632 = vld [vmem:[#allocation2 + $0x10] sm:$0xff]
    %v633 = vld [vmem:[#allocation2 + $0x18] sm:$0xff]
    %v634 = vld [vmem:[#allocation2 + $0x20] sm:$0xff]
    %v635 = vld [vmem:[#allocation2 + $0x28] sm:$0xff]
    %v636 = vld [vmem:[#allocation2 + $0x30] sm:$0xff]
    %v637 = vld [vmem:[#allocation2 + $0x38] sm:$0xff]
    %v638 = vld [vmem:[#allocation2 + $0x40] sm:$0xff]
    %v639 = vld [vmem:[#allocation2 + $0x48] sm:$0xff]
    %v640 = vld [vmem:[#allocation2 + $0x50] sm:$0xff]
    %v641 = vld [vmem:[#allocation2 + $0x58] sm:$0xff]
    %v642 = vld [vmem:[#allocation2 + $0x60] sm:$0xff]
    %v643 = vld [vmem:[#allocation2 + $0x68] sm:$0xff]
    %v644 = vld [vmem:[#allocation2 + $0x70] sm:$0xff]
    %v645 = vld [vmem:[#allocation2 + $0x78] sm:$0xff]
    %v646 = vpack.c.bf16 %v631, %v630
    %v647 = vpack.c.bf16 %v633, %v632
    %v648 = vpack.c.bf16 %v635, %v634
    %v649 = vpack.c.bf16 %v637, %v636
    %v650 = vpack.c.bf16 %v639, %v638
    %v651 = vpack.c.bf16 %v641, %v640
    %v652 = vpack.c.bf16 %v643, %v642
    %v653 = vpack.c.bf16 %v645, %v644
    %654 = vmatprep.subr.bf16.mxu0 0
    %655 = vmatpush1.bf16.msra.mxu0 %v653
    %656 = vmatprep.subr.bf16.mxu0 0
    %657 = vmatpush1.bf16.msra.mxu0 %v652
    %658 = vmatprep.subr.bf16.mxu0 0
    %659 = vmatpush1.bf16.msra.mxu0 %v651
    %660 = vmatprep.subr.bf16.mxu0 0
    %661 = vmatpush1.bf16.msra.mxu0 %v650
    %662 = vmatprep.subr.bf16.mxu0 0
    %663 = vmatpush1.bf16.msra.mxu0 %v649
    %664 = vmatprep.subr.bf16.mxu0 0
    %665 = vmatpush1.bf16.msra.mxu0 %v648
    %666 = vmatprep.subr.bf16.mxu0 0
    %667 = vmatpush1.bf16.msra.mxu0 %v647
    %668 = vmatprep.subr.bf16.mxu0 0
    %669 = vmatpush1.bf16.msra.mxu0 %v646
    %670 = vmatprep.subr.bf16.mxu0 0
    %671 = vmatpush2.bf16.msra.mxu0 0
    %672 = vmatprep.subr.bf16.mxu0 0
    %673 = vmatpush2.bf16.msra.mxu0 0
    %674 = vmatprep.subr.bf16.mxu0 0
    %675 = vmatpush2.bf16.msra.mxu0 0
    %676 = vmatprep.subr.bf16.mxu0 0
    %677 = vmatpush2.bf16.msra.mxu0 0
    %678 = vmatprep.subr.bf16.mxu0 0
    %679 = vmatpush2.bf16.msra.mxu0 0
    %680 = vmatprep.subr.bf16.mxu0 0
    %681 = vmatpush2.bf16.msra.mxu0 0
    %682 = vmatprep.subr.bf16.mxu0 0
    %683 = vmatpush2.bf16.msra.mxu0 0
    %684 = vmatprep.subr.bf16.mxu0 0
    %685 = vmatpush2.bf16.msra.mxu0 0
    %686 = vmatprep.mubr.bf16.mxu0 0
    %687 = vmatmul.mubr.bf16.gmra.mxu0 %v622
    %v688 = vpop.f32.mrf.mxu0
    %v689 = vadd.f32 0.0, %v688
    %v690 = vpop.f32.mrf.mxu0
    %v691 = vpop.f32.mrf.mxu0
    %v692 = vadd.f32 0.0, %v691
    %v693 = vpop.f32.mrf.mxu0
    %694 = vmatprep.mubr.bf16.mxu0 0
    %695 = vmatmul.mubr.bf16.gmra.mxu0 %v623
    %v696 = vpop.f32.mrf.mxu0
    %v697 = vadd.f32 0.0, %v696
    %v698 = vpop.f32.mrf.mxu0
    %v699 = vpop.f32.mrf.mxu0
    %v700 = vadd.f32 0.0, %v699
    %v701 = vpop.f32.mrf.mxu0
    %702 = vmatprep.mubr.bf16.mxu0 0
    %703 = vmatmul.mubr.bf16.gmra.mxu0 %v624
    %v704 = vpop.f32.mrf.mxu0
    %v705 = vadd.f32 0.0, %v704
    %v706 = vpop.f32.mrf.mxu0
    %v707 = vpop.f32.mrf.mxu0
    %v708 = vadd.f32 0.0, %v707
    %v709 = vpop.f32.mrf.mxu0
    %710 = vmatprep.mubr.bf16.mxu0 0
    %711 = vmatmul.mubr.bf16.gmra.mxu0 %v625
    %v712 = vpop.f32.mrf.mxu0
    %v713 = vadd.f32 0.0, %v712
    %v714 = vpop.f32.mrf.mxu0
    %v715 = vpop.f32.mrf.mxu0
    %v716 = vadd.f32 0.0, %v715
    %v717 = vpop.f32.mrf.mxu0
    %718 = vmatprep.mubr.bf16.mxu0 0
    %719 = vmatmul.mubr.bf16.gmra.mxu0 %v626
    %v720 = vpop.f32.mrf.mxu0
    %v721 = vadd.f32 0.0, %v720
    %v722 = vpop.f32.mrf.mxu0
    %v723 = vpop.f32.mrf.mxu0
    %v724 = vadd.f32 0.0, %v723
    %v725 = vpop.f32.mrf.mxu0
    %726 = vmatprep.mubr.bf16.mxu0 0
    %727 = vmatmul.mubr.bf16.gmra.mxu0 %v627
    %v728 = vpop.f32.mrf.mxu0
    %v729 = vadd.f32 0.0, %v728
    %v730 = vpop.f32.mrf.mxu0
    %v731 = vpop.f32.mrf.mxu0
    %v732 = vadd.f32 0.0, %v731
    %v733 = vpop.f32.mrf.mxu0
    %734 = vmatprep.mubr.bf16.mxu0 0
    %735 = vmatmul.mubr.bf16.gmra.mxu0 %v628
    %v736 = vpop.f32.mrf.mxu0
    %v737 = vadd.f32 0.0, %v736
    %v738 = vpop.f32.mrf.mxu0
    %v739 = vpop.f32.mrf.mxu0
    %v740 = vadd.f32 0.0, %v739
    %v741 = vpop.f32.mrf.mxu0
    %742 = vmatprep.mubr.bf16.mxu0 0
    %743 = vmatmul.mubr.bf16.gmra.mxu0 %v629
    %v744 = vpop.f32.mrf.mxu0
    %v745 = vadd.f32 0.0, %v744
    %v746 = vpop.f32.mrf.mxu0
    %v747 = vpop.f32.mrf.mxu0
    %v748 = vadd.f32 0.0, %v747
    %v749 = vpop.f32.mrf.mxu0
    %750 = vdwg.mxu0
    %v751 = vpack.c.bf16 %v692, %v689
    %v752 = vpack.c.bf16 %v700, %v697
    %v753 = vpack.c.bf16 %v708, %v705
    %v754 = vpack.c.bf16 %v716, %v713
    %v755 = vpack.c.bf16 %v724, %v721
    %v756 = vpack.c.bf16 %v732, %v729
    %v757 = vpack.c.bf16 %v740, %v737
    %v758 = vpack.c.bf16 %v748, %v745
    %759 = vmatprep.subr.bf16.mxu0 0
    %760 = vmatpush1.bf16.msra.mxu0 %v758
    %761 = vmatprep.subr.bf16.mxu0 0
    %762 = vmatpush1.bf16.msra.mxu0 %v757
    %763 = vmatprep.subr.bf16.mxu0 0
    %764 = vmatpush1.bf16.msra.mxu0 %v756
    %765 = vmatprep.subr.bf16.mxu0 0
    %766 = vmatpush1.bf16.msra.mxu0 %v755
    %767 = vmatprep.subr.bf16.mxu0 0
    %768 = vmatpush1.bf16.msra.mxu0 %v754
    %769 = vmatprep.subr.bf16.mxu0 0
    %770 = vmatpush1.bf16.msra.mxu0 %v753
    %771 = vmatprep.subr.bf16.mxu0 0
    %772 = vmatpush1.bf16.msra.mxu0 %v752
    %773 = vmatprep.subr.bf16.mxu0 0
    %774 = vmatpush1.bf16.msra.mxu0 %v751
    %775 = vmatprep.subr.bf16.mxu0 0
    %776 = vmatpush2.bf16.msra.mxu0 0
    %777 = vmatprep.subr.bf16.mxu0 0
    %778 = vmatpush2.bf16.msra.mxu0 0
    %779 = vmatprep.subr.bf16.mxu0 0
    %780 = vmatpush2.bf16.msra.mxu0 0
    %781 = vmatprep.subr.bf16.mxu0 0
    %782 = vmatpush2.bf16.msra.mxu0 0
    %783 = vmatprep.subr.bf16.mxu0 0
    %784 = vmatpush2.bf16.msra.mxu0 0
    %785 = vmatprep.subr.bf16.mxu0 0
    %786 = vmatpush2.bf16.msra.mxu0 0
    %787 = vmatprep.subr.bf16.mxu0 0
    %788 = vmatpush2.bf16.msra.mxu0 0
    %789 = vmatprep.subr.bf16.mxu0 0
    %790 = vmatpush2.bf16.msra.mxu0 0
    %791 = vmatprep.mubr.bf16.mxu0 0
    %792 = vmatmul.mubr.bf16.gmra.mxu0 %v188
    %v793 = vpop.f32.mrf.mxu0
    %v794 = vadd.f32 0.0, %v793
    %v795 = vpop.f32.mrf.mxu0
    %v796 = vpop.f32.mrf.mxu0
    %v797 = vadd.f32 0.0, %v796
    %v798 = vpop.f32.mrf.mxu0
    %799 = vmatprep.mubr.bf16.mxu0 0
    %800 = vmatmul.mubr.bf16.gmra.mxu0 %v189
    %v801 = vpop.f32.mrf.mxu0
    %v802 = vadd.f32 0.0, %v801
    %v803 = vpop.f32.mrf.mxu0
    %v804 = vpop.f32.mrf.mxu0
    %v805 = vadd.f32 0.0, %v804
    %v806 = vpop.f32.mrf.mxu0
    %807 = vmatprep.mubr.bf16.mxu0 0
    %808 = vmatmul.mubr.bf16.gmra.mxu0 %v190
    %v809 = vpop.f32.mrf.mxu0
    %v810 = vadd.f32 0.0, %v809
    %v811 = vpop.f32.mrf.mxu0
    %v812 = vpop.f32.mrf.mxu0
    %v813 = vadd.f32 0.0, %v812
    %v814 = vpop.f32.mrf.mxu0
    %815 = vmatprep.mubr.bf16.mxu0 0
    %816 = vmatmul.mubr.bf16.gmra.mxu0 %v191
    %v817 = vpop.f32.mrf.mxu0
    %v818 = vadd.f32 0.0, %v817
    %v819 = vpop.f32.mrf.mxu0
    %v820 = vpop.f32.mrf.mxu0
    %v821 = vadd.f32 0.0, %v820
    %v822 = vpop.f32.mrf.mxu0
    %823 = vmatprep.mubr.bf16.mxu0 0
    %824 = vmatmul.mubr.bf16.gmra.mxu0 %v192
    %v825 = vpop.f32.mrf.mxu0
    %v826 = vadd.f32 0.0, %v825
    %v827 = vpop.f32.mrf.mxu0
    %v828 = vpop.f32.mrf.mxu0
    %v829 = vadd.f32 0.0, %v828
    %v830 = vpop.f32.mrf.mxu0
    %831 = vmatprep.mubr.bf16.mxu0 0
    %832 = vmatmul.mubr.bf16.gmra.mxu0 %v193
    %v833 = vpop.f32.mrf.mxu0
    %v834 = vadd.f32 0.0, %v833
    %v835 = vpop.f32.mrf.mxu0
    %v836 = vpop.f32.mrf.mxu0
    %v837 = vadd.f32 0.0, %v836
    %v838 = vpop.f32.mrf.mxu0
    %839 = vmatprep.mubr.bf16.mxu0 0
    %840 = vmatmul.mubr.bf16.gmra.mxu0 %v194
    %v841 = vpop.f32.mrf.mxu0
    %v842 = vadd.f32 0.0, %v841
    %v843 = vpop.f32.mrf.mxu0
    %v844 = vpop.f32.mrf.mxu0
    %v845 = vadd.f32 0.0, %v844
    %v846 = vpop.f32.mrf.mxu0
    %847 = vmatprep.mubr.bf16.mxu0 0
    %848 = vmatmul.mubr.bf16.gmra.mxu0 %v195
    %v849 = vpop.f32.mrf.mxu0
    %v850 = vadd.f32 0.0, %v849
    %v851 = vpop.f32.mrf.mxu0
    %v852 = vpop.f32.mrf.mxu0
    %v853 = vadd.f32 0.0, %v852
    %v854 = vpop.f32.mrf.mxu0
    %855 = vdwg.mxu0
    %v856 = vadd.f32 %v689, %v794
    %v857 = vadd.f32 %v692, %v797
    %v858 = vadd.f32 %v697, %v802
    %v859 = vadd.f32 %v700, %v805
    %v860 = vadd.f32 %v705, %v810
    %v861 = vadd.f32 %v708, %v813
    %v862 = vadd.f32 %v713, %v818
    %v863 = vadd.f32 %v716, %v821
    %v864 = vadd.f32 %v721, %v826
    %v865 = vadd.f32 %v724, %v829
    %v866 = vadd.f32 %v729, %v834
    %v867 = vadd.f32 %v732, %v837
    %v868 = vadd.f32 %v737, %v842
    %v869 = vadd.f32 %v740, %v845
    %v870 = vadd.f32 %v745, %v850
    %v871 = vadd.f32 %v748, %v853
    %v872 = vpack.c.bf16 %v857, %v856
    %v873 = vpack.c.bf16 %v859, %v858
    %v874 = vpack.c.bf16 %v861, %v860
    %v875 = vpack.c.bf16 %v863, %v862
    %v876 = vpack.c.bf16 %v865, %v864
    %v877 = vpack.c.bf16 %v867, %v866
    %v878 = vpack.c.bf16 %v869, %v868
    %v879 = vpack.c.bf16 %v871, %v870
    %880 = vmatprep.subr.bf16.mxu0 0
    %881 = vmatpush1.bf16.msra.mxu0 %v879
    %882 = vmatprep.subr.bf16.mxu0 0
    %883 = vmatpush1.bf16.msra.mxu0 %v878
    %884 = vmatprep.subr.bf16.mxu0 0
    %885 = vmatpush1.bf16.msra.mxu0 %v877
    %886 = vmatprep.subr.bf16.mxu0 0
    %887 = vmatpush1.bf16.msra.mxu0 %v876
    %888 = vmatprep.subr.bf16.mxu0 0
    %889 = vmatpush1.bf16.msra.mxu0 %v875
    %890 = vmatprep.subr.bf16.mxu0 0
    %891 = vmatpush1.bf16.msra.mxu0 %v874
    %892 = vmatprep.subr.bf16.mxu0 0
    %893 = vmatpush1.bf16.msra.mxu0 %v873
    %894 = vmatprep.subr.bf16.mxu0 0
    %895 = vmatpush1.bf16.msra.mxu0 %v872
    %896 = vmatprep.subr.bf16.mxu0 0
    %897 = vmatpush2.bf16.msra.mxu0 0
    %898 = vmatprep.subr.bf16.mxu0 0
    %899 = vmatpush2.bf16.msra.mxu0 0
    %900 = vmatprep.subr.bf16.mxu0 0
    %901 = vmatpush2.bf16.msra.mxu0 0
    %902 = vmatprep.subr.bf16.mxu0 0
    %903 = vmatpush2.bf16.msra.mxu0 0
    %904 = vmatprep.subr.bf16.mxu0 0
    %905 = vmatpush2.bf16.msra.mxu0 0
    %906 = vmatprep.subr.bf16.mxu0 0
    %907 = vmatpush2.bf16.msra.mxu0 0
    %908 = vmatprep.subr.bf16.mxu0 0
    %909 = vmatpush2.bf16.msra.mxu0 0
    %910 = vmatprep.subr.bf16.mxu0 0
    %911 = vmatpush2.bf16.msra.mxu0 0
    %912 = vmatprep.mubr.bf16.mxu0 0
    %913 = vmatmul.mubr.bf16.gmra.mxu0 %v188
    %v914 = vpop.f32.mrf.mxu0
    %v915 = vadd.f32 0.0, %v914
    %v916 = vpop.f32.mrf.mxu0
    %v917 = vpop.f32.mrf.mxu0
    %v918 = vadd.f32 0.0, %v917
    %v919 = vpop.f32.mrf.mxu0
    %920 = vmatprep.mubr.bf16.mxu0 0
    %921 = vmatmul.mubr.bf16.gmra.mxu0 %v189
    %v922 = vpop.f32.mrf.mxu0
    %v923 = vadd.f32 0.0, %v922
    %v924 = vpop.f32.mrf.mxu0
    %v925 = vpop.f32.mrf.mxu0
    %v926 = vadd.f32 0.0, %v925
    %v927 = vpop.f32.mrf.mxu0
    %928 = vmatprep.mubr.bf16.mxu0 0
    %929 = vmatmul.mubr.bf16.gmra.mxu0 %v190
    %v930 = vpop.f32.mrf.mxu0
    %v931 = vadd.f32 0.0, %v930
    %v932 = vpop.f32.mrf.mxu0
    %v933 = vpop.f32.mrf.mxu0
    %v934 = vadd.f32 0.0, %v933
    %v935 = vpop.f32.mrf.mxu0
    %936 = vmatprep.mubr.bf16.mxu0 0
    %937 = vmatmul.mubr.bf16.gmra.mxu0 %v191
    %v938 = vpop.f32.mrf.mxu0
    %v939 = vadd.f32 0.0, %v938
    %v940 = vpop.f32.mrf.mxu0
    %v941 = vpop.f32.mrf.mxu0
    %v942 = vadd.f32 0.0, %v941
    %v943 = vpop.f32.mrf.mxu0
    %944 = vmatprep.mubr.bf16.mxu0 0
    %945 = vmatmul.mubr.bf16.gmra.mxu0 %v192
    %v946 = vpop.f32.mrf.mxu0
    %v947 = vadd.f32 0.0, %v946
    %v948 = vpop.f32.mrf.mxu0
    %v949 = vpop.f32.mrf.mxu0
    %v950 = vadd.f32 0.0, %v949
    %v951 = vpop.f32.mrf.mxu0
    %952 = vmatprep.mubr.bf16.mxu0 0
    %953 = vmatmul.mubr.bf16.gmra.mxu0 %v193
    %v954 = vpop.f32.mrf.mxu0
    %v955 = vadd.f32 0.0, %v954
    %v956 = vpop.f32.mrf.mxu0
    %v957 = vpop.f32.mrf.mxu0
    %v958 = vadd.f32 0.0, %v957
    %v959 = vpop.f32.mrf.mxu0
    %960 = vmatprep.mubr.bf16.mxu0 0
    %961 = vmatmul.mubr.bf16.gmra.mxu0 %v194
    %v962 = vpop.f32.mrf.mxu0
    %v963 = vadd.f32 0.0, %v962
    %v964 = vpop.f32.mrf.mxu0
    %v965 = vpop.f32.mrf.mxu0
    %v966 = vadd.f32 0.0, %v965
    %v967 = vpop.f32.mrf.mxu0
    %968 = vmatprep.mubr.bf16.mxu0 0
    %969 = vmatmul.mubr.bf16.gmra.mxu0 %v195
    %v970 = vpop.f32.mrf.mxu0
    %v971 = vadd.f32 0.0, %v970
    %v972 = vpop.f32.mrf.mxu0
    %v973 = vpop.f32.mrf.mxu0
    %v974 = vadd.f32 0.0, %v973
    %v975 = vpop.f32.mrf.mxu0
    %976 = vdwg.mxu0
    %v977 = vmul.f32 %v856, 0.5
    %v978 = vmul.f32 %v857, 0.5
    %v979 = vmul.f32 %v858, 0.5
    %v980 = vmul.f32 %v859, 0.5
    %v981 = vmul.f32 %v860, 0.5
    %v982 = vmul.f32 %v861, 0.5
    %v983 = vmul.f32 %v862, 0.5
    %v984 = vmul.f32 %v863, 0.5
    %v985 = vmul.f32 %v864, 0.5
    %v986 = vmul.f32 %v865, 0.5
    %v987 = vmul.f32 %v866, 0.5
    %v988 = vmul.f32 %v867, 0.5
    %v989 = vmul.f32 %v868, 0.5
    %v990 = vmul.f32 %v869, 0.5
    %v991 = vmul.f32 %v870, 0.5
    %v992 = vmul.f32 %v871, 0.5
    %v993 = vsub.f32 %v977, %v915
    %v994 = vsub.f32 %v978, %v918
    %v995 = vsub.f32 %v979, %v923
    %v996 = vsub.f32 %v980, %v926
    %v997 = vsub.f32 %v981, %v931
    %v998 = vsub.f32 %v982, %v934
    %v999 = vsub.f32 %v983, %v939
    %v1000 = vsub.f32 %v984, %v942
    %v1001 = vsub.f32 %v985, %v947
    %v1002 = vsub.f32 %v986, %v950
    %v1003 = vsub.f32 %v987, %v955
    %v1004 = vsub.f32 %v988, %v958
    %v1005 = vsub.f32 %v989, %v963
    %v1006 = vsub.f32 %v990, %v966
    %v1007 = vsub.f32 %v991, %v971
    %v1008 = vsub.f32 %v992, %v974
    %v1009 = vld [vmem:[%s4] sm:$0x1]
    %v1011 = vlaneseq
    %v1012 = vshrl.u32 %v1011, 7
    %v1013 = vsub.s32 0, %v1012
    %v1014 = vrot.slane %v1009, %v1013
    %v1016 = vadd.f32 %v993, %v1014
    %v1017 = vadd.f32 %v994, %v1014
    %v1018 = vadd.f32 %v995, %v1014
    %v1019 = vadd.f32 %v996, %v1014
    %v1020 = vadd.f32 %v997, %v1014
    %v1021 = vadd.f32 %v998, %v1014
    %v1022 = vadd.f32 %v999, %v1014
    %v1023 = vadd.f32 %v1000, %v1014
    %v1024 = vadd.f32 %v1001, %v1014
    %v1025 = vadd.f32 %v1002, %v1014
    %v1026 = vadd.f32 %v1003, %v1014
    %v1027 = vadd.f32 %v1004, %v1014
    %v1028 = vadd.f32 %v1005, %v1014
    %v1029 = vadd.f32 %v1006, %v1014
    %v1030 = vadd.f32 %v1007, %v1014
    %v1031 = vadd.f32 %v1008, %v1014
    %v1032 = vlaneseq
    %v1033 = vand.u32 %v1032, 127
    %vm1034 = vcmp.lt.s32.totalorder %v1033, 8
    %v1035 = vsel %vm1034, %v1016, -1e+30
    %v1036 = vsel %vm1034, %v1017, -1e+30
    %v1037 = vsel %vm1034, %v1018, -1e+30
    %v1038 = vsel %vm1034, %v1019, -1e+30
    %v1039 = vsel %vm1034, %v1020, -1e+30
    %v1040 = vsel %vm1034, %v1021, -1e+30
    %v1041 = vsel %vm1034, %v1022, -1e+30
    %v1042 = vsel %vm1034, %v1023, -1e+30
    %v1043 = vsel %vm1034, %v1024, -1e+30
    %v1044 = vsel %vm1034, %v1025, -1e+30
    %v1045 = vsel %vm1034, %v1026, -1e+30
    %v1046 = vsel %vm1034, %v1027, -1e+30
    %v1047 = vsel %vm1034, %v1028, -1e+30
    %v1048 = vsel %vm1034, %v1029, -1e+30
    %v1049 = vsel %vm1034, %v1030, -1e+30
    %v1050 = vsel %vm1034, %v1031, -1e+30
    %1051 = vmax.xlane.f32.xlu0 %v1035
    %v1052 = vpop.xlane.xlu0 %1051
    %1053 = vmax.xlane.f32.xlu0 %v1036
    %v1054 = vpop.xlane.xlu0 %1053
    %1055 = vmax.xlane.f32.xlu0 %v1037
    %v1056 = vpop.xlane.xlu0 %1055
    %1057 = vmax.xlane.f32.xlu0 %v1038
    %v1058 = vpop.xlane.xlu0 %1057
    %1059 = vmax.xlane.f32.xlu0 %v1039
    %v1060 = vpop.xlane.xlu0 %1059
    %1061 = vmax.xlane.f32.xlu0 %v1040
    %v1062 = vpop.xlane.xlu0 %1061
    %1063 = vmax.xlane.f32.xlu0 %v1041
    %v1064 = vpop.xlane.xlu0 %1063
    %1065 = vmax.xlane.f32.xlu0 %v1042
    %v1066 = vpop.xlane.xlu0 %1065
    %1067 = vmax.xlane.f32.xlu0 %v1043
    %v1068 = vpop.xlane.xlu0 %1067
    %1069 = vmax.xlane.f32.xlu0 %v1044
    %v1070 = vpop.xlane.xlu0 %1069
    %1071 = vmax.xlane.f32.xlu0 %v1045
    %v1072 = vpop.xlane.xlu0 %1071
    %1073 = vmax.xlane.f32.xlu0 %v1046
    %v1074 = vpop.xlane.xlu0 %1073
    %1075 = vmax.xlane.f32.xlu0 %v1047
    %v1076 = vpop.xlane.xlu0 %1075
    %1077 = vmax.xlane.f32.xlu0 %v1048
    %v1078 = vpop.xlane.xlu0 %1077
    %1079 = vmax.xlane.f32.xlu0 %v1049
    %v1080 = vpop.xlane.xlu0 %1079
    %1081 = vmax.xlane.f32.xlu0 %v1050
    %v1082 = vpop.xlane.xlu0 %1081
    %v1083 = vsub.f32 %v1035, %v1052
    %v1084 = vsub.f32 %v1036, %v1054
    %v1085 = vsub.f32 %v1037, %v1056
    %v1086 = vsub.f32 %v1038, %v1058
    %v1087 = vsub.f32 %v1039, %v1060
    %v1088 = vsub.f32 %v1040, %v1062
    %v1089 = vsub.f32 %v1041, %v1064
    %v1090 = vsub.f32 %v1042, %v1066
    %v1091 = vsub.f32 %v1043, %v1068
    %v1092 = vsub.f32 %v1044, %v1070
    %v1093 = vsub.f32 %v1045, %v1072
    %v1094 = vsub.f32 %v1046, %v1074
    %v1095 = vsub.f32 %v1047, %v1076
    %v1096 = vsub.f32 %v1048, %v1078
    %v1097 = vsub.f32 %v1049, %v1080
    %v1098 = vsub.f32 %v1050, %v1082
    %v1099 = vmul.f32 %v1083, 1.442695
    %v1100 = vpow.pop %v1099
    %v1101 = vmul.f32 %v1084, 1.442695
    %v1102 = vpow.pop %v1101
    %v1103 = vmul.f32 %v1085, 1.442695
    %v1104 = vpow.pop %v1103
    %v1105 = vmul.f32 %v1086, 1.442695
    %v1106 = vpow.pop %v1105
    %v1107 = vmul.f32 %v1087, 1.442695
    %v1108 = vpow.pop %v1107
    %v1109 = vmul.f32 %v1088, 1.442695
    %v1110 = vpow.pop %v1109
    %v1111 = vmul.f32 %v1089, 1.442695
    %v1112 = vpow.pop %v1111
    %v1113 = vmul.f32 %v1090, 1.442695
    %v1114 = vpow.pop %v1113
    %v1115 = vmul.f32 %v1091, 1.442695
    %v1116 = vpow.pop %v1115
    %v1117 = vmul.f32 %v1092, 1.442695
    %v1118 = vpow.pop %v1117
    %v1119 = vmul.f32 %v1093, 1.442695
    %v1120 = vpow.pop %v1119
    %v1121 = vmul.f32 %v1094, 1.442695
    %v1122 = vpow.pop %v1121
    %v1123 = vmul.f32 %v1095, 1.442695
    %v1124 = vpow.pop %v1123
    %v1125 = vmul.f32 %v1096, 1.442695
    %v1126 = vpow.pop %v1125
    %v1127 = vmul.f32 %v1097, 1.442695
    %v1128 = vpow.pop %v1127
    %v1129 = vmul.f32 %v1098, 1.442695
    %v1130 = vpow.pop %v1129
    %1131 = vadd.xlane.f32.xlu0 %v1100
    %v1132 = vpop.xlane.xlu0 %1131
    %1133 = vadd.xlane.f32.xlu0 %v1102
    %v1134 = vpop.xlane.xlu0 %1133
    %1135 = vadd.xlane.f32.xlu0 %v1104
    %v1136 = vpop.xlane.xlu0 %1135
    %1137 = vadd.xlane.f32.xlu0 %v1106
    %v1138 = vpop.xlane.xlu0 %1137
    %1139 = vadd.xlane.f32.xlu0 %v1108
    %v1140 = vpop.xlane.xlu0 %1139
    %1141 = vadd.xlane.f32.xlu0 %v1110
    %v1142 = vpop.xlane.xlu0 %1141
    %1143 = vadd.xlane.f32.xlu0 %v1112
    %v1144 = vpop.xlane.xlu0 %1143
    %1145 = vadd.xlane.f32.xlu0 %v1114
    %v1146 = vpop.xlane.xlu0 %1145
    %1147 = vadd.xlane.f32.xlu0 %v1116
    %v1148 = vpop.xlane.xlu0 %1147
    %1149 = vadd.xlane.f32.xlu0 %v1118
    %v1150 = vpop.xlane.xlu0 %1149
    %1151 = vadd.xlane.f32.xlu0 %v1120
    %v1152 = vpop.xlane.xlu0 %1151
    %1153 = vadd.xlane.f32.xlu0 %v1122
    %v1154 = vpop.xlane.xlu0 %1153
    %1155 = vadd.xlane.f32.xlu0 %v1124
    %v1156 = vpop.xlane.xlu0 %1155
    %1157 = vadd.xlane.f32.xlu0 %v1126
    %v1158 = vpop.xlane.xlu0 %1157
    %1159 = vadd.xlane.f32.xlu0 %v1128
    %v1160 = vpop.xlane.xlu0 %1159
    %1161 = vadd.xlane.f32.xlu0 %v1130
    %v1162 = vpop.xlane.xlu0 %1161
    %v1163 = vlog2.pop %v1132
    %v1164 = vmul.f32 %v1163, 0.6931472
    %v1165 = vlog2.pop %v1134
    %v1166 = vmul.f32 %v1165, 0.6931472
    %v1167 = vlog2.pop %v1136
    %v1168 = vmul.f32 %v1167, 0.6931472
    %v1169 = vlog2.pop %v1138
    %v1170 = vmul.f32 %v1169, 0.6931472
    %v1171 = vlog2.pop %v1140
    %v1172 = vmul.f32 %v1171, 0.6931472
    %v1173 = vlog2.pop %v1142
    %v1174 = vmul.f32 %v1173, 0.6931472
    %v1175 = vlog2.pop %v1144
    %v1176 = vmul.f32 %v1175, 0.6931472
    %v1177 = vlog2.pop %v1146
    %v1178 = vmul.f32 %v1177, 0.6931472
    %v1179 = vlog2.pop %v1148
    %v1180 = vmul.f32 %v1179, 0.6931472
    %v1181 = vlog2.pop %v1150
    %v1182 = vmul.f32 %v1181, 0.6931472
    %v1183 = vlog2.pop %v1152
    %v1184 = vmul.f32 %v1183, 0.6931472
    %v1185 = vlog2.pop %v1154
    %v1186 = vmul.f32 %v1185, 0.6931472
    %v1187 = vlog2.pop %v1156
    %v1188 = vmul.f32 %v1187, 0.6931472
    %v1189 = vlog2.pop %v1158
    %v1190 = vmul.f32 %v1189, 0.6931472
    %v1191 = vlog2.pop %v1160
    %v1192 = vmul.f32 %v1191, 0.6931472
    %v1193 = vlog2.pop %v1162
    %v1194 = vmul.f32 %v1193, 0.6931472
    %v1195 = vsub.f32 %v1083, %v1164
    %v1196 = vsub.f32 %v1084, %v1166
    %v1197 = vsub.f32 %v1085, %v1168
    %v1198 = vsub.f32 %v1086, %v1170
    %v1199 = vsub.f32 %v1087, %v1172
    %v1200 = vsub.f32 %v1088, %v1174
    %v1201 = vsub.f32 %v1089, %v1176
    %v1202 = vsub.f32 %v1090, %v1178
    %v1203 = vsub.f32 %v1091, %v1180
    %v1204 = vsub.f32 %v1092, %v1182
    %v1205 = vsub.f32 %v1093, %v1184
    %v1206 = vsub.f32 %v1094, %v1186
    %v1207 = vsub.f32 %v1095, %v1188
    %v1208 = vsub.f32 %v1096, %v1190
    %v1209 = vsub.f32 %v1097, %v1192
    %v1210 = vsub.f32 %v1098, %v1194
    %1211 = vst [vmem:[#allocation5] sm:$0xff] %v1195
    %1212 = vst [vmem:[#allocation5 + $0x8] sm:$0xff] %v1196
    %1213 = vst [vmem:[#allocation5 + $0x10] sm:$0xff] %v1197
    %1214 = vst [vmem:[#allocation5 + $0x18] sm:$0xff] %v1198
    %1215 = vst [vmem:[#allocation5 + $0x20] sm:$0xff] %v1199
    %1216 = vst [vmem:[#allocation5 + $0x28] sm:$0xff] %v1200
    %1217 = vst [vmem:[#allocation5 + $0x30] sm:$0xff] %v1201
    %1218 = vst [vmem:[#allocation5 + $0x38] sm:$0xff] %v1202
    %1219 = vst [vmem:[#allocation5 + $0x40] sm:$0xff] %v1203
    %1220 = vst [vmem:[#allocation5 + $0x48] sm:$0xff] %v1204
    %1221 = vst [vmem:[#allocation5 + $0x50] sm:$0xff] %v1205
    %1222 = vst [vmem:[#allocation5 + $0x58] sm:$0xff] %v1206
    %1223 = vst [vmem:[#allocation5 + $0x60] sm:$0xff] %v1207
    %1224 = vst [vmem:[#allocation5 + $0x68] sm:$0xff] %v1208
    %1225 = vst [vmem:[#allocation5 + $0x70] sm:$0xff] %v1209
    %1226 = vst [vmem:[#allocation5 + $0x78] sm:$0xff] %v1210
    // Predicated region
    $region26: #{tpu_custom_call.1} parent=1 // pred_check
      _
    $region27: #{tpu_custom_call.1} parent=1 // pred_check_branch
      %1228 = sbr.rel (0) target = $region29
    $region28: #{tpu_custom_call.1} parent=1 // pred_region
      %s1230 = ssub.s32 2048, 2048
      %1231 = vsyncadd [#allocation4], %s1230
      %s1232 = sshll.u32 [#allocation5], 4
      %s1233 = int_to_ptr.vmem [resolvable:$true] %s1232
      %1238 = dma.vmem_to_hbm [thread:$0]  %s1233, 2048, %s5, [#allocation4], 128, 128, 8
    $region29: #{tpu_custom_call.1} parent=1 // pred_fallthru
      _
    // Predicated region
    $region30: #{tpu_custom_call.1} parent=1 // pred_check
      _
    $region31: #{tpu_custom_call.1} parent=1 // pred_check_branch
      %1240 = sbr.rel (0) target = $region33
    $region32: #{tpu_custom_call.1} parent=1 // pred_region
      %1241 = dma.done [#allocation4], 2048
    $region33: #{tpu_custom_call.1} parent=1 // pred_fallthru
      _
    %1242 = vsyncpa [#allocation3], 1
    %1243 = vsyncpa [#allocation4], 1

</llo_original>
